<compile_context>
chip_gen: v5e
topology: v5e:2x2
jax: 0.10.0
libtpu: 0.0.40
codegen_flags: <defaults>
</compile_context>

<pallas_src>
import functools

import jax
import jax.numpy as jnp
from jax.experimental import pallas as pl
from jax.experimental.pallas import tpu as pltpu

SUBLANE = 8  # f32 sublane height


def _round_up(n: int, m: int) -> int:
    return ((n + m - 1) // m) * m


# ---------------------------------------------------------------------------
# Kernel: fused  relu(x @ W1 + b1) @ W2 + b2  on one (TB, in) batch tile.
# ---------------------------------------------------------------------------
def policy_mlp_kernel(x_ref, w1_ref, b1_ref, w2_ref, b2_ref, o_ref):
    # First linear: (TB, In) @ (In, H) + (1, H), f32 accumulate on the MXU.
    x = x_ref[...].astype(w1_ref.dtype)
    h = jnp.dot(x, w1_ref[...], preferred_element_type=jnp.float32)
    h = jnp.maximum(h + b1_ref[...], 0.0)          # bias + ReLU in f32
    # Second linear: (TB, H) @ (H, Out) + (1, Out).
    q = jnp.dot(h.astype(w2_ref.dtype), w2_ref[...],
                preferred_element_type=jnp.float32)
    o_ref[...] = (q + b2_ref[...]).astype(o_ref.dtype)


# ---------------------------------------------------------------------------
# One-time parameter preparation (hoisted out of the per-call path).
# Accepts PyTorch nn.Linear layout: w1 (hidden, in), w2 (out, hidden).
# ---------------------------------------------------------------------------
def prepare_policy_params(w1, b1, w2, b2, *, compute_dtype=jnp.float32):
    hidden, input_size = w1.shape
    output_size = w2.shape[0]
    return {
        "w1": jnp.asarray(w1, compute_dtype).T,                     # (in, hidden)
        "b1": jnp.asarray(b1, jnp.float32).reshape(1, hidden),      # (1, hidden)
        "w2": jnp.asarray(w2, compute_dtype).T,                     # (hidden, out)
        "b2": jnp.asarray(b2, jnp.float32).reshape(1, output_size), # (1, out)
        "input_size": input_size,
        "hidden": hidden,
        "output_size": output_size,
    }


# ---------------------------------------------------------------------------
# Batch tile selection: big tiles (few ~0.35us grid steps), but at least two
# grid steps for large batches so v7x's second TensorCore participates.
# ---------------------------------------------------------------------------
def _batch_tile(batch: int, block_b: int) -> int:
    b_ceil = _round_up(batch, SUBLANE)
    if b_ceil <= 256:
        # Tiny/moderate batch: one tile covering the whole (padded) batch.
        return b_ceil
    # Split into >= 2 grid steps (feeds both TCs on v7x), capped at block_b.
    half = _round_up(pl.cdiv(b_ceil, 2), SUBLANE)
    return min(half, block_b)


# ---------------------------------------------------------------------------
# Forward: grid over the batch axis; weights VMEM-resident across grid steps.
# ---------------------------------------------------------------------------
def policy_forward(x, params, *, block_b: int = 1024):
    """q_values = relu(x @ w1 + b1) @ w2 + b2, computed by a Pallas kernel.

    x: (B, input_size) float32. Returns (B, output_size) float32.
    Note: for an RL loop with many distinct batch sizes, bucket B on the
    caller side (e.g. next power of two) to limit recompiled variants.
    """
    B, input_size = x.shape
    w1, b1, w2, b2 = params["w1"], params["b1"], params["w2"], params["b2"]
    hidden = params["hidden"]
    output_size = params["output_size"]

    tb = _batch_tile(B, block_b)
    grid = (pl.cdiv(B, tb),)

    flops = 2 * B * input_size * hidden + 2 * B * hidden * output_size
    bytes_accessed = 4 * (x.size + w1.size + b1.size + w2.size + b2.size
                          + B * output_size)

    out = pl.pallas_call(
        policy_mlp_kernel,
        out_shape=jax.ShapeDtypeStruct((B, output_size), jnp.float32),
        grid=grid,
        in_specs=[
            pl.BlockSpec((tb, input_size), lambda i: (i, 0)),        # x tile
            pl.BlockSpec((input_size, hidden), lambda i: (0, 0)),    # W1 (resident)
            pl.BlockSpec((1, hidden), lambda i: (0, 0)),             # b1 (resident)
            pl.BlockSpec((hidden, output_size), lambda i: (0, 0)),   # W2 (resident)
            pl.BlockSpec((1, output_size), lambda i: (0, 0)),        # b2 (resident)
        ],
        out_specs=pl.BlockSpec((tb, output_size), lambda i: (i, 0)),
        compiler_params=pltpu.CompilerParams(
            dimension_semantics=("parallel",),  # both TCs on v7x when grid >= 2
        ),
        cost_estimate=pl.CostEstimate(
            flops=flops, transcendentals=0, bytes_accessed=bytes_accessed),
    )(x, w1, b1, w2, b2)
    return out


# ---------------------------------------------------------------------------
# Deterministic parameter init (PyTorch Linear shapes + uniform bounds).
# ---------------------------------------------------------------------------
def init_policy_params(key, input_size, hidden, output_size):
    k1, k2, k3, k4 = jax.random.split(key, 4)
    bound1 = 1.0 / jnp.sqrt(input_size)
    bound2 = 1.0 / jnp.sqrt(hidden)
    w1 = jax.random.uniform(k1, (hidden, input_size), jnp.float32, -bound1, bound1)
    b1 = jax.random.uniform(k2, (hidden,), jnp.float32, -bound1, bound1)
    w2 = jax.random.uniform(k3, (output_size, hidden), jnp.float32, -bound2, bound2)
    b2 = jax.random.uniform(k4, (output_size,), jnp.float32, -bound2, bound2)
    return w1, b1, w2, b2


if __name__ == "__main__":
    # Small shapes consistent with the module: hidden=32 is fixed by Policy.
    batch, input_size, hidden, output_size = 8, 16, 32, 4

    key = jax.random.PRNGKey(0)
    kx, kp = jax.random.split(key)
    x = jax.random.normal(kx, (batch, input_size), jnp.float32)
    w1, b1, w2, b2 = init_policy_params(kp, input_size, hidden, output_size)

    # Layout prep happens once, outside the per-call forward path.
    params = prepare_policy_params(w1, b1, w2, b2)

    forward = jax.jit(functools.partial(policy_forward, params=params))
    q_values = jax.block_until_ready(forward(x))

    # Pure-JAX reference check of the forward semantics (PyTorch layout).
    def reference(xv):
        return jnp.maximum(xv @ w1.T + b1, 0.0) @ w2.T + b2

    assert q_values.shape == (batch, output_size)
    assert jnp.allclose(q_values, reference(x), atol=1e-5, rtol=1e-5)

    # Larger batch: exercises the >=2-grid-step path (v7x dual-core sharding).
    big_x = jax.random.normal(kx, (1000, input_size), jnp.float32)
    big_q = jax.block_until_ready(forward(big_x))
    assert big_q.shape == (1000, output_size)
    assert jnp.allclose(big_q, reference(big_x), atol=1e-5, rtol=1e-5)

    # Ragged batch (not a multiple of 8): exercises partial-block handling
    # without any wrapper-side pad/slice passes.
    odd_x = jax.random.normal(kx, (37, input_size), jnp.float32)
    odd_q = jax.block_until_ready(forward(odd_x))
    assert odd_q.shape == (37, output_size)
    assert jnp.allclose(odd_q, reference(odd_x), atol=1e-5, rtol=1e-5)

    # TODO(synk): select_action (softmax + multinomial sampling) and
    # optimize_temperature (Adam training loop) are host-side / stochastic
    # utilities outside the forward hot path; not implemented as kernels.

    print("KERNEL_OK")
</pallas_src>

<mosaic_0001>
module attributes {stable_mosaic.version = 11 : i64} {
  func.func @policy_mlp_kernel(%arg0: i32, %arg1: memref<8x16xf32, #tpu.memory_space<vmem>>, %arg2: memref<16x32xf32, #tpu.memory_space<vmem>>, %arg3: memref<1x32xf32, #tpu.memory_space<vmem>>, %arg4: memref<32x4xf32, #tpu.memory_space<vmem>>, %arg5: memref<1x4xf32, #tpu.memory_space<vmem>>, %arg6: memref<8x4xf32, #tpu.memory_space<vmem>>) attributes {dimension_semantics = [#tpu.dimension_semantics<parallel>], iteration_bounds = array<i64: 1>, scalar_prefetch = 0 : i64, scratch_operands = 0 : i64, tpu.core_type = #tpu.core_type<tc>, window_params = [{transform_indices = @transform_0, window_bounds = array<i64: 8, 16>}, {pipeline_mode = #tpu.pipeline_mode<synchronous>, transform_indices = @transform_1, window_bounds = array<i64: 16, 32>}, {pipeline_mode = #tpu.pipeline_mode<synchronous>, transform_indices = @transform_2, window_bounds = array<i64: 1, 32>}, {pipeline_mode = #tpu.pipeline_mode<synchronous>, transform_indices = @transform_3, window_bounds = array<i64: 32, 4>}, {pipeline_mode = #tpu.pipeline_mode<synchronous>, transform_indices = @transform_4, window_bounds = array<i64: 1, 4>}, {transform_indices = @transform_5, window_bounds = array<i64: 8, 4>}]} {
    %c0 = arith.constant 0 : index
    %c0_0 = arith.constant 0 : index
    %0 = vector.load %arg1[%c0, %c0_0] : memref<8x16xf32, #tpu.memory_space<vmem>>, vector<8x16xf32>
    %c0_1 = arith.constant 0 : index
    %c0_2 = arith.constant 0 : index
    %1 = vector.load %arg2[%c0_1, %c0_2] : memref<16x32xf32, #tpu.memory_space<vmem>>, vector<16x32xf32>
    %cst = arith.constant dense<0.000000e+00> : vector<8x32xf32>
    %2 = tpu.matmul %0, %1, %cst {dimension_numbers = #tpu.dot_dimension_numbers<[1], [0], [0], [1], [0, 0, 1, 1], [], []>} : vector<8x16xf32>, vector<16x32xf32>, vector<8x32xf32> -> vector<8x32xf32>
    %c0_3 = arith.constant 0 : index
    %c0_4 = arith.constant 0 : index
    %3 = vector.load %arg3[%c0_3, %c0_4] : memref<1x32xf32, #tpu.memory_space<vmem>>, vector<1x32xf32>
    %4 = vector.broadcast %3 : vector<1x32xf32> to vector<8x32xf32>
    %5 = arith.addf %2, %4 : vector<8x32xf32>
    %cst_5 = arith.constant 0.000000e+00 : f32
    %6 = vector.broadcast %cst_5 : f32 to vector<8x32xf32>
    %7 = arith.maximumf %5, %6 : vector<8x32xf32>
    %c0_6 = arith.constant 0 : index
    %c0_7 = arith.constant 0 : index
    %8 = vector.load %arg4[%c0_6, %c0_7] : memref<32x4xf32, #tpu.memory_space<vmem>>, vector<32x4xf32>
    %cst_8 = arith.constant dense<0.000000e+00> : vector<8x4xf32>
    %9 = tpu.matmul %7, %8, %cst_8 {dimension_numbers = #tpu.dot_dimension_numbers<[1], [0], [0], [1], [0, 0, 1, 1], [], []>} : vector<8x32xf32>, vector<32x4xf32>, vector<8x4xf32> -> vector<8x4xf32>
    %c0_9 = arith.constant 0 : index
    %c0_10 = arith.constant 0 : index
    %10 = vector.load %arg5[%c0_9, %c0_10] : memref<1x4xf32, #tpu.memory_space<vmem>>, vector<1x4xf32>
    %11 = vector.broadcast %10 : vector<1x4xf32> to vector<8x4xf32>
    %12 = arith.addf %9, %11 : vector<8x4xf32>
    %c0_11 = arith.constant 0 : index
    %c0_12 = arith.constant 0 : index
    %13 = vector.load %arg6[%c0_11, %c0_12] : memref<8x4xf32, #tpu.memory_space<vmem>>, vector<8x4xf32>
    tpu.vector_store %arg6[%c0_11, %c0_12], %12 {strides = array<i32>} : memref<8x4xf32, #tpu.memory_space<vmem>>, vector<8x4xf32>,
    return
  }
  func.func @transform_0(%arg0: i32) -> (i32, i32) {
    %c0_i32 = arith.constant 0 : i32
    %c0_i32_0 = arith.constant 0 : i32
    return %arg0, %c0_i32 : i32, i32
  }
  func.func @transform_1(%arg0: i32) -> (i32, i32) {
    %c0_i32 = arith.constant 0 : i32
    %c0_i32_0 = arith.constant 0 : i32
    %c0_i32_1 = arith.constant 0 : i32
    return %c0_i32, %c0_i32_0 : i32, i32
  }
  func.func @transform_2(%arg0: i32) -> (i32, i32) {
    %c0_i32 = arith.constant 0 : i32
    %c0_i32_0 = arith.constant 0 : i32
    %c0_i32_1 = arith.constant 0 : i32
    return %c0_i32, %c0_i32_0 : i32, i32
  }
  func.func @transform_3(%arg0: i32) -> (i32, i32) {
    %c0_i32 = arith.constant 0 : i32
    %c0_i32_0 = arith.constant 0 : i32
    %c0_i32_1 = arith.constant 0 : i32
    return %c0_i32, %c0_i32_0 : i32, i32
  }
  func.func @transform_4(%arg0: i32) -> (i32, i32) {
    %c0_i32 = arith.constant 0 : i32
    %c0_i32_0 = arith.constant 0 : i32
    %c0_i32_1 = arith.constant 0 : i32
    return %c0_i32, %c0_i32_0 : i32, i32
  }
  func.func @transform_5(%arg0: i32) -> (i32, i32) {
    %c0_i32 = arith.constant 0 : i32
    %c0_i32_0 = arith.constant 0 : i32
    return %arg0, %c0_i32 : i32, i32
  }
}

</mosaic_0001>

<llo_original>
// kernel: policy_forward.1
$region0: #{policy_forward.1}
  #allocation0 [shape = 'u32[]', space=smem, size = 0x4, offset = 0x4, fixed_abs, tag = 'smem constant byte address 0x4 - core index']
  #allocation1 [shape = 'u32[72,128]{1,0:T(1,128)}', space=vmem, size = 0x9000, scoped, tag = 'internal scratch']
  %s0 = inlined_call_operand.hbm [shape: f32[8,16], index: 0, kind: input, shape index: {}]
  %s1 = inlined_call_operand.hbm [shape: f32[16,32], index: 1, kind: input, shape index: {}]
  %s2 = inlined_call_operand.hbm [shape: f32[1,32], index: 2, kind: input, shape index: {}]
  %s3 = inlined_call_operand.hbm [shape: f32[32,4], index: 3, kind: input, shape index: {}]
  %s4 = inlined_call_operand.vmem [shape: f32[1,4], index: 4, kind: input, shape index: {}]
  %s5 = inlined_call_operand.vmem [shape: f32[8,4], index: 5, kind: output, shape index: {}]
  %s6 = sld [smem:[#allocation0]]
  $region46: #{policy_forward.1} parent=0
    _
  %s8 = ssub.s32 1, %s6
  %s9 = scalar_select 0, %s8, %s6
  $region1: #{policy_forward.1} parent=0
    #allocation2 [shape = 'u8[4096]{0}', space=vmem, size = 0x1000, scoped, tag = 'input window, operand 0, single buffered']
    #allocation3 [shape = 's32[1]{0}', space=sflag, size = 0x4, scoped, tag = 'scoped memory for policy_forward.1']
    #allocation4 [shape = 'u8[8192]{0}', space=vmem, size = 0x2000, scoped, tag = 'input window, operand 1, single buffered']
    #allocation5 [shape = 's32[1]{0}', space=sflag, size = 0x4, scoped, tag = 'scoped memory for policy_forward.1']
    #allocation6 [shape = 'u8[512]{0}', space=vmem, size = 0x400, scoped, tag = 'input window, operand 2, single buffered']
    #allocation7 [shape = 'u8[16384]{0}', space=vmem, size = 0x4000, scoped, tag = 'input window, operand 3, single buffered']
    #allocation8 [shape = 's32[1]{0}', space=sflag, size = 0x4, scoped, tag = 'scoped memory for policy_forward.1']
    %10 = vsyncpa [#allocation3], 0
    %11 = vsyncpa [#allocation5], 0
    %12 = vsyncpa [#allocation8], 0
    // Predicated region
    $region2: #{policy_forward.1} parent=1 // pred_check
      _
    $region3: #{policy_forward.1} parent=1 // pred_check_branch
      %14 = sbr.rel (0) target = $region5
    $region4: #{policy_forward.1} parent=1 // pred_region
      %16 = vsyncadd [#allocation3], 0
      %s18 = sshll.u32 %s0, 4
      %s19 = int_to_ptr.hbm [resolvable:$true] %s18
      %s20 = sshll.u32 [#allocation2], 4
      %s21 = int_to_ptr.vmem [resolvable:$true] %s20
      %23 = dma.hbm_to_vmem [thread:$0]  %s19, 128, %s21, [#allocation3]
    $region5: #{policy_forward.1} parent=1 // pred_fallthru
      _
    // Predicated region
    $region6: #{policy_forward.1} parent=1 // pred_check
      _
    $region7: #{policy_forward.1} parent=1 // pred_check_branch
      %25 = sbr.rel (0) target = $region9
    $region8: #{policy_forward.1} parent=1 // pred_region
      %27 = vsyncadd [#allocation5], 0
      %s28 = sshll.u32 %s1, 4
      %s29 = int_to_ptr.hbm [resolvable:$true] %s28
      %s30 = sshll.u32 [#allocation4], 4
      %s31 = int_to_ptr.vmem [resolvable:$true] %s30
      %36 = dma.hbm_to_vmem [thread:$0]  %s29, 256, %s31, [#allocation5], 128, 128, 8
    $region9: #{policy_forward.1} parent=1 // pred_fallthru
      _
    // Predicated region
    $region10: #{policy_forward.1} parent=1 // pred_check
      _
    $region11: #{policy_forward.1} parent=1 // pred_check_branch
      %38 = sbr.rel (0) target = $region13
    $region12: #{policy_forward.1} parent=1 // pred_region
      %40 = vsyncadd [#allocation5], 0
      %s42 = sshll.u32 %s2, 4
      %s43 = int_to_ptr.hbm [resolvable:$true] %s42
      %s44 = sshll.u32 [#allocation6], 4
      %s45 = int_to_ptr.vmem [resolvable:$true] %s44
      %47 = dma.hbm_to_vmem [thread:$0]  %s43, 16, %s45, [#allocation5]
    $region13: #{policy_forward.1} parent=1 // pred_fallthru
      _
    // Predicated region
    $region14: #{policy_forward.1} parent=1 // pred_check
      _
    $region15: #{policy_forward.1} parent=1 // pred_check_branch
      %49 = sbr.rel (0) target = $region17
    $region16: #{policy_forward.1} parent=1 // pred_region
      %51 = vsyncadd [#allocation8], 0
      %s52 = sshll.u32 %s3, 4
      %s53 = int_to_ptr.hbm [resolvable:$true] %s52
      %s54 = sshll.u32 [#allocation7], 4
      %s55 = int_to_ptr.vmem [resolvable:$true] %s54
      %60 = dma.hbm_to_vmem [thread:$0]  %s53, 512, %s55, [#allocation8], 128, 128, 8
    $region17: #{policy_forward.1} parent=1 // pred_fallthru
      _
    // Predicated region
    $region18: #{policy_forward.1} parent=1 // pred_check
      _
    $region19: #{policy_forward.1} parent=1 // pred_check_branch
      %62 = sbr.rel (0) target = $region21
    $region20: #{policy_forward.1} parent=1 // pred_region
      _
    $region21: #{policy_forward.1} parent=1 // pred_fallthru
      _
    // Predicated region
    $region22: #{policy_forward.1} parent=1 // pred_check
      _
    $region23: #{policy_forward.1} parent=1 // pred_check_branch
      %64 = sbr.rel (0) target = $region25
    $region24: #{policy_forward.1} parent=1 // pred_region
      %66 = dma.done [#allocation3], 128
    $region25: #{policy_forward.1} parent=1 // pred_fallthru
      _
    // Predicated region
    $region26: #{policy_forward.1} parent=1 // pred_check
      _
    $region27: #{policy_forward.1} parent=1 // pred_check_branch
      %68 = sbr.rel (0) target = $region29
    $region28: #{policy_forward.1} parent=1 // pred_region
      %70 = dma.done [#allocation5], 256
    $region29: #{policy_forward.1} parent=1 // pred_fallthru
      _
    // Predicated region
    $region30: #{policy_forward.1} parent=1 // pred_check
      _
    $region31: #{policy_forward.1} parent=1 // pred_check_branch
      %72 = sbr.rel (0) target = $region33
    $region32: #{policy_forward.1} parent=1 // pred_region
      %74 = dma.done [#allocation5], 16
    $region33: #{policy_forward.1} parent=1 // pred_fallthru
      _
    // Predicated region
    $region34: #{policy_forward.1} parent=1 // pred_check
      _
    $region35: #{policy_forward.1} parent=1 // pred_check_branch
      %76 = sbr.rel (0) target = $region37
    $region36: #{policy_forward.1} parent=1 // pred_region
      %78 = dma.done [#allocation8], 512
    $region37: #{policy_forward.1} parent=1 // pred_fallthru
      _
    %v79 = vld [vmem:[#allocation2] sm:$0xff]
    %v80 = vld [vmem:[#allocation4] sm:$0xff]
    %v81 = vld [vmem:[#allocation4 + $0x8] sm:$0xff]
    %v82 = vld [vmem:[#allocation6] sm:$0x1]
    %v84 = vperm.slane %v82, 0
    %vm86 = vcmask 130048
    %v88 = vsel %vm86, %v79, 0
    %90 = vmatpush.msra.mxu0 0.0
    %91 = vmatpush.msra.mxu0 0.0
    %92 = vmatpush.msra.mxu0 0.0
    %93 = vmatpush.msra.mxu0 0.0
    %94 = vmatpush.msra.mxu0 0.0
    %95 = vmatpush.msra.mxu0 0.0
    %96 = vmatpush.msra.mxu0 0.0
    %97 = vmatpush.msra.mxu0 0.0
    %98 = vmatpush.msra.mxu0 0.0
    %99 = vmatpush.msra.mxu0 0.0
    %100 = vmatpush.msra.mxu0 0.0
    %101 = vmatpush.msra.mxu0 0.0
    %102 = vmatpush.msra.mxu0 0.0
    %103 = vmatpush.msra.mxu0 0.0
    %104 = vmatpush.msra.mxu0 %v81
    %105 = vmatpush.msra.mxu0 %v80
    %106 = vmatmul.f32.gmra.mxu0 %v88
    %v107 = vpop.f32.mrf.mxu0
    %v108 = vadd.f32 %v84, %v107
    %109 = vdwg.mxu0
    %v110 = vmax.f32 %v108, 0.0
    %v111 = vld [vmem:[#allocation7] sm:$0xff]
    %v112 = vld [vmem:[#allocation7 + $0x8] sm:$0xff]
    %v113 = vld [vmem:[#allocation7 + $0x10] sm:$0xff]
    %v114 = vld [vmem:[#allocation7 + $0x18] sm:$0xff]
    %v115 = vld [vmem:[%s4] sm:$0x1]
    %v117 = vperm.slane %v115, 0
    %vm119 = vcmask 261120
    %v121 = vsel %vm119, %v110, 0
    %123 = vmatpush.msra.mxu0 0.0
    %124 = vmatpush.msra.mxu0 0.0
    %125 = vmatpush.msra.mxu0 0.0
    %126 = vmatpush.msra.mxu0 0.0
    %127 = vmatpush.msra.mxu0 0.0
    %128 = vmatpush.msra.mxu0 0.0
    %129 = vmatpush.msra.mxu0 0.0
    %130 = vmatpush.msra.mxu0 0.0
    %131 = vmatpush.msra.mxu0 0.0
    %132 = vmatpush.msra.mxu0 0.0
    %133 = vmatpush.msra.mxu0 0.0
    %134 = vmatpush.msra.mxu0 0.0
    %135 = vmatpush.msra.mxu0 %v114
    %136 = vmatpush.msra.mxu0 %v113
    %137 = vmatpush.msra.mxu0 %v112
    %138 = vmatpush.msra.mxu0 %v111
    %139 = vmatmul.f32.gmra.mxu0 %v121
    %v140 = vpop.f32.mrf.mxu0
    %v141 = vadd.f32 %v117, %v140
    %142 = vdwg.mxu0
    %vm143 = vcmask 31744
    %144 = vst.msk [vmem:[%s5] sm:$0xff] %vm143, %v141
    // Predicated region
    $region38: #{policy_forward.1} parent=1 // pred_check
      _
    $region39: #{policy_forward.1} parent=1 // pred_check_branch
      %146 = sbr.rel (0) target = $region41
    $region40: #{policy_forward.1} parent=1 // pred_region
      _
    $region41: #{policy_forward.1} parent=1 // pred_fallthru
      _
    // Predicated region
    $region42: #{policy_forward.1} parent=1 // pred_check
      _
    $region43: #{policy_forward.1} parent=1 // pred_check_branch
      %148 = sbr.rel (0) target = $region45
    $region44: #{policy_forward.1} parent=1 // pred_region
      _
    $region45: #{policy_forward.1} parent=1 // pred_fallthru
      _
    %149 = vsyncpa [#allocation3], 1
    %150 = vsyncpa [#allocation5], 1
    %151 = vsyncpa [#allocation8], 1

</llo_original>
